<compile_context>
chip_gen: v5e
topology: v5e:2x2
jax: 0.10.0
libtpu: 0.0.40
codegen_flags: <defaults>
</compile_context>

<pallas_src>
import functools

import jax
import jax.numpy as jnp
from jax import lax
from jax.experimental import pallas as pl
from jax.experimental.pallas import tpu as pltpu

_LANES = 128
_SUBLANES = 8


def _round_up(x, m):
    return ((x + m - 1) // m) * m


def _neher_loss_kernel(pred_ref, targ_ref, params_ref, bias_ref, out_ref,
                       acc_ref, *, tile_r, n_rows_valid, needs_mask,
                       inv_n_pred, lam_over_np, gamma_over_nvb, delta_over_nvc):
    step = pl.program_id(0)
    nsteps = pl.num_programs(0)

    @pl.when(step == 0)
    def _():
        acc_ref[...] = jnp.zeros_like(acc_ref)

    # Per-tile squared difference; accumulate into a resident (8,128) vector
    # accumulator with pure VPU adds (no per-tile cross-lane reduction).
    d = pred_ref[...] - targ_ref[...]
    sq = d * d
    if needs_mask:
        # Only the final partial block can read garbage rows -> mask by the
        # global row index (all 128 lanes of a valid row are valid data).
        row = lax.broadcasted_iota(jnp.int32, (tile_r, _LANES), 0) + step * tile_r
        sq = jnp.where(row < n_rows_valid, sq, 0.0)
    acc_ref[...] += jnp.sum(
        sq.reshape(tile_r // _SUBLANES, _SUBLANES, _LANES), axis=0)

    # Epilogue: one cross-lane reduce + tiny regularizer terms + scalar store.
    @pl.when(step == nsteps - 1)
    def _():
        mse = jnp.sum(acc_ref[...]) * inv_n_pred

        p = params_ref[...]
        reg = lam_over_np * jnp.sum(jnp.maximum(p, 0.0))

        b = bias_ref[...]
        reg += gamma_over_nvb * jnp.sum(b[0:1, :] * b[0:1, :])
        reg += delta_over_nvc * jnp.sum(b[1:2, :] * b[1:2, :])

        out_ref[0, 0] = mse + reg


def neher_loss(pred, target, params, virus_bias, vaccine_bias,
               *, lam, gamma, delta, tile_rows=1024):
    """Pallas implementation of NeherLoss.forward. Returns a scalar float32."""
    pred = jnp.asarray(pred, jnp.float32).reshape(-1)
    target = jnp.asarray(target, jnp.float32).reshape(-1)
    params = jnp.asarray(params, jnp.float32).reshape(-1)
    virus_bias = jnp.asarray(virus_bias, jnp.float32).reshape(-1)
    vaccine_bias = jnp.asarray(vaccine_bias, jnp.float32).reshape(-1)

    n_pred = pred.size
    n_params = params.size
    n_vb = virus_bias.size
    n_vc = vaccine_bias.size

    tile_target = max(_SUBLANES, _round_up(int(tile_rows), _SUBLANES))

    # --- pred/target -> sublane-dense (rows, 128) f32 slabs ---
    if n_pred % _LANES == 0 and n_pred >= _SUBLANES * _LANES:
        # Copy-free path: reshape is a bitcast, no extra HBM traffic.
        rows = n_pred // _LANES
        tile_r = min(tile_target, (rows // _SUBLANES) * _SUBLANES)
        pred2d = pred.reshape(rows, _LANES)
        targ2d = target.reshape(rows, _LANES)
        needs_mask = (rows % tile_r) != 0
    else:
        # Fallback: single zero-pad (pads contribute exactly 0 to the MSE).
        rows0 = _round_up(pl.cdiv(n_pred, _LANES), _SUBLANES)
        tile_r = min(tile_target, rows0)
        rows = _round_up(rows0, tile_r)
        padded = rows * _LANES
        pred2d = jnp.pad(pred, (0, padded - n_pred)).reshape(rows, _LANES)
        targ2d = jnp.pad(target, (0, padded - n_pred)).reshape(rows, _LANES)
        needs_mask = False

    grid_steps = pl.cdiv(rows, tile_r)

    # --- params -> lane-dense zero-padded slab (relu(0) = 0, harmless) ---
    p_rows = max(1, pl.cdiv(n_params, _LANES))
    params_slab = jnp.pad(params, (0, p_rows * _LANES - n_params)).reshape(
        p_rows, _LANES)

    # --- both bias vectors packed into one resident (2, P) slab (0^2 = 0) ---
    p_bias = _round_up(max(n_vb, n_vc, 1), _LANES)
    bias_slab = jnp.stack([
        jnp.pad(virus_bias, (0, p_bias - n_vb)),
        jnp.pad(vaccine_bias, (0, p_bias - n_vc)),
    ], axis=0)  # (2, p_bias)

    kernel = functools.partial(
        _neher_loss_kernel,
        tile_r=tile_r,
        n_rows_valid=rows,
        needs_mask=needs_mask,
        inv_n_pred=1.0 / float(n_pred),
        lam_over_np=float(lam) / float(n_params),
        gamma_over_nvb=float(gamma) / float(n_vb),
        delta_over_nvc=float(delta) / float(n_vc),
    )

    # VMEM budget: 2 operands x 2 buffers of the streaming block + resident
    # regularizer slabs + headroom; capped at 32 MiB (safe on v7x's 64 MiB).
    block_bytes = tile_r * _LANES * 4
    resident_bytes = (params_slab.size + bias_slab.size) * 4
    vmem_limit = int(min(max(4 * block_bytes + 2 * resident_bytes + (2 << 20),
                             8 << 20),
                         32 << 20))

    cost = pl.CostEstimate(
        flops=int(3 * rows * _LANES + 2 * params_slab.size
                  + 3 * bias_slab.size),
        transcendentals=0,
        bytes_accessed=int((2 * rows * _LANES + params_slab.size
                            + bias_slab.size) * 4 + 4),
    )

    out = pl.pallas_call(
        kernel,
        out_shape=jax.ShapeDtypeStruct((1, 1), jnp.float32),
        grid_spec=pltpu.PrefetchScalarGridSpec(
            num_scalar_prefetch=0,
            grid=(grid_steps,),
            in_specs=[
                pl.BlockSpec((tile_r, _LANES), lambda i: (i, 0)),
                pl.BlockSpec((tile_r, _LANES), lambda i: (i, 0)),
                pl.BlockSpec(params_slab.shape, lambda i: (0, 0)),
                pl.BlockSpec(bias_slab.shape, lambda i: (0, 0)),
            ],
            out_specs=pl.BlockSpec(memory_space=pltpu.SMEM),
            scratch_shapes=[pltpu.VMEM((_SUBLANES, _LANES), jnp.float32)],
        ),
        compiler_params=pltpu.CompilerParams(
            dimension_semantics=("arbitrary",),
            vmem_limit_bytes=vmem_limit,
        ),
        cost_estimate=cost,
    )(pred2d, targ2d, params_slab, bias_slab)
    return out[0, 0]


def neher_loss_ref(pred, target, params, virus_bias, vaccine_bias,
                   *, lam, gamma, delta):
    """Pure-JAX reference for verification."""
    loss = jnp.mean((pred - target) ** 2)
    loss += lam * jnp.mean(jnp.maximum(params, 0.0))
    loss += gamma * jnp.mean(virus_bias ** 2)
    loss += delta * jnp.mean(vaccine_bias ** 2)
    return loss


def _check(key, batch, n_virus, n_vaccine, lam, gamma, delta, **kw):
    k_pred, k_targ, k_par, k_vb, k_vc = jax.random.split(key, 5)
    pred = jax.random.normal(k_pred, (batch,), dtype=jnp.float32)
    target = jax.random.normal(k_targ, (batch,), dtype=jnp.float32)
    params = jax.random.normal(k_par, (n_virus, n_vaccine), dtype=jnp.float32)
    virus_bias = jax.random.normal(k_vb, (n_virus,), dtype=jnp.float32)
    vaccine_bias = jax.random.normal(k_vc, (n_vaccine,), dtype=jnp.float32)

    out = neher_loss(pred, target, params, virus_bias, vaccine_bias,
                     lam=lam, gamma=gamma, delta=delta, **kw)
    out = jax.block_until_ready(out)
    ref = neher_loss_ref(pred, target, params, virus_bias, vaccine_bias,
                         lam=lam, gamma=gamma, delta=delta)
    assert jnp.allclose(out, ref, rtol=1e-5, atol=1e-5), (batch, out, ref)


if __name__ == "__main__":
    lam, gamma, delta = 0.1, 0.01, 0.001
    key = jax.random.PRNGKey(0)
    k1, k2, k3 = jax.random.split(key, 3)

    # case 1: tiny, non-aligned batch (zero-pad fallback path, single tile).
    _check(k1, batch=32, n_virus=8, n_vaccine=16,
           lam=lam, gamma=gamma, delta=delta)

    # case 2: 128-aligned batch -> copy-free bitcast path; small tile forces a
    # multi-step grid with a masked partial final block (33 rows, tile 8).
    _check(k2, batch=33 * 128, n_virus=8, n_vaccine=16,
           lam=lam, gamma=gamma, delta=delta, tile_rows=8)

    # case 3: moderate non-aligned batch -> padded path with multiple tiles.
    _check(k3, batch=5000, n_virus=16, n_vaccine=24,
           lam=lam, gamma=gamma, delta=delta, tile_rows=8)

    print("KERNEL_OK")
</pallas_src>

<mosaic_0001>
module attributes {stable_mosaic.version = 11 : i64} {
  func.func @_neher_loss_kernel(%arg0: i32, %arg1: memref<8x128xf32, #tpu.memory_space<vmem>>, %arg2: memref<8x128xf32, #tpu.memory_space<vmem>>, %arg3: memref<1x128xf32, #tpu.memory_space<vmem>>, %arg4: memref<2x128xf32, #tpu.memory_space<vmem>>, %arg5: memref<1x1xf32, #tpu.memory_space<smem>>, %arg6: memref<8x128xf32, #tpu.memory_space<vmem>>) attributes {dimension_semantics = [#tpu.dimension_semantics<arbitrary>], iteration_bounds = array<i64: 1>, scalar_prefetch = 0 : i64, scratch_operands = 1 : i64, tpu.core_type = #tpu.core_type<tc>, window_params = [{transform_indices = @transform_0, window_bounds = array<i64: 8, 128>}, {transform_indices = @transform_1, window_bounds = array<i64: 8, 128>}, {pipeline_mode = #tpu.pipeline_mode<synchronous>, transform_indices = @transform_2, window_bounds = array<i64: 1, 128>}, {pipeline_mode = #tpu.pipeline_mode<synchronous>, transform_indices = @transform_3, window_bounds = array<i64: 2, 128>}, {transform_indices = @transform_4, window_bounds = array<i64: 1, 1>}]} {
    %c0_i32 = arith.constant 0 : i32
    %0 = arith.cmpi eq, %arg0, %c0_i32 : i32
    %1 = arith.extui %0 : i1 to i32
    %c0_i32_0 = arith.constant 0 : i32
    %2 = arith.cmpi ne, %1, %c0_i32_0 : i32
    scf.if %2 {
      %cst_10 = arith.constant 0.000000e+00 : f32
      %15 = vector.broadcast %cst_10 : f32 to vector<8x128xf32>
      %c0_11 = arith.constant 0 : index
      %c0_12 = arith.constant 0 : index
      %16 = vector.load %arg6[%c0_11, %c0_12] : memref<8x128xf32, #tpu.memory_space<vmem>>, vector<8x128xf32>
      tpu.vector_store %arg6[%c0_11, %c0_12], %15 {strides = array<i32>} : memref<8x128xf32, #tpu.memory_space<vmem>>, vector<8x128xf32>,
    } else {
    }
    %c0 = arith.constant 0 : index
    %c0_1 = arith.constant 0 : index
    %3 = vector.load %arg1[%c0, %c0_1] : memref<8x128xf32, #tpu.memory_space<vmem>>, vector<8x128xf32>
    %c0_2 = arith.constant 0 : index
    %c0_3 = arith.constant 0 : index
    %4 = vector.load %arg2[%c0_2, %c0_3] : memref<8x128xf32, #tpu.memory_space<vmem>>, vector<8x128xf32>
    %5 = arith.subf %3, %4 : vector<8x128xf32>
    %6 = arith.mulf %5, %5 : vector<8x128xf32>
    %c0_4 = arith.constant 0 : index
    %c0_5 = arith.constant 0 : index
    %7 = vector.load %arg6[%c0_4, %c0_5] : memref<8x128xf32, #tpu.memory_space<vmem>>, vector<8x128xf32>
    %8 = vector.shape_cast %6 : vector<8x128xf32> to vector<1x8x128xf32>
    %cst = arith.constant dense<0.000000e+00> : vector<8x128xf32>
    %9 = vector.multi_reduction <add>, %8, %cst [0] : vector<1x8x128xf32> to vector<8x128xf32>
    %10 = arith.addf %7, %9 : vector<8x128xf32>
    %c0_6 = arith.constant 0 : index
    %c0_7 = arith.constant 0 : index
    %11 = vector.load %arg6[%c0_6, %c0_7] : memref<8x128xf32, #tpu.memory_space<vmem>>, vector<8x128xf32>
    tpu.vector_store %arg6[%c0_6, %c0_7], %10 {strides = array<i32>} : memref<8x128xf32, #tpu.memory_space<vmem>>, vector<8x128xf32>,
    %c0_i32_8 = arith.constant 0 : i32
    %12 = arith.cmpi eq, %arg0, %c0_i32_8 : i32
    %13 = arith.extui %12 : i1 to i32
    %c0_i32_9 = arith.constant 0 : i32
    %14 = arith.cmpi ne, %13, %c0_i32_9 : i32
    scf.if %14 {
      %c0_10 = arith.constant 0 : index
      %c0_11 = arith.constant 0 : index
      %15 = vector.load %arg6[%c0_10, %c0_11] : memref<8x128xf32, #tpu.memory_space<vmem>>, vector<8x128xf32>
      %16 = vector.shape_cast %15 : vector<8x128xf32> to vector<1x8x128xf32>
      %cst_12 = arith.constant dense<0.000000e+00> : vector<1xf32>
      %17 = vector.multi_reduction <add>, %16, %cst_12 [1, 2] : vector<1x8x128xf32> to vector<1xf32>
      %18 = vector.shape_cast %17 : vector<1xf32> to vector<1x1x1xf32>
      %19 = vector.extract %18[0, 0, 0] : f32 from vector<1x1x1xf32>
      %cst_13 = arith.constant 3.125000e-02 : f32
      %20 = arith.mulf %19, %cst_13 : f32
      %c0_14 = arith.constant 0 : index
      %c0_15 = arith.constant 0 : index
      %21 = vector.load %arg3[%c0_14, %c0_15] : memref<1x128xf32, #tpu.memory_space<vmem>>, vector<1x128xf32>
      %cst_16 = arith.constant 0.000000e+00 : f32
      %22 = vector.broadcast %cst_16 : f32 to vector<1x128xf32>
      %23 = arith.maximumf %21, %22 : vector<1x128xf32>
      %24 = vector.shape_cast %23 : vector<1x128xf32> to vector<1x1x128xf32>
      %cst_17 = arith.constant dense<0.000000e+00> : vector<1xf32>
      %25 = vector.multi_reduction <add>, %24, %cst_17 [1, 2] : vector<1x1x128xf32> to vector<1xf32>
      %26 = vector.shape_cast %25 : vector<1xf32> to vector<1x1x1xf32>
      %27 = vector.extract %26[0, 0, 0] : f32 from vector<1x1x1xf32>
      %cst_18 = arith.constant 7.812500e-04 : f32
      %28 = arith.mulf %cst_18, %27 : f32
      %c0_19 = arith.constant 0 : index
      %c0_20 = arith.constant 0 : index
      %29 = vector.load %arg4[%c0_19, %c0_20] : memref<2x128xf32, #tpu.memory_space<vmem>>, vector<2x128xf32>
      %30 = vector.extract_strided_slice %29 {offsets = [0, 0], sizes = [1, 128], strides = [1, 1]} : vector<2x128xf32> to vector<1x128xf32>
      %31 = vector.extract_strided_slice %29 {offsets = [0, 0], sizes = [1, 128], strides = [1, 1]} : vector<2x128xf32> to vector<1x128xf32>
      %32 = arith.mulf %30, %31 : vector<1x128xf32>
      %33 = vector.shape_cast %32 : vector<1x128xf32> to vector<1x1x128xf32>
      %cst_21 = arith.constant dense<0.000000e+00> : vector<1xf32>
      %34 = vector.multi_reduction <add>, %33, %cst_21 [1, 2] : vector<1x1x128xf32> to vector<1xf32>
      %35 = vector.shape_cast %34 : vector<1xf32> to vector<1x1x1xf32>
      %36 = vector.extract %35[0, 0, 0] : f32 from vector<1x1x1xf32>
      %cst_22 = arith.constant 1.250000e-03 : f32
      %37 = arith.mulf %cst_22, %36 : f32
      %38 = arith.addf %28, %37 : f32
      %39 = vector.extract_strided_slice %29 {offsets = [1, 0], sizes = [1, 128], strides = [1, 1]} : vector<2x128xf32> to vector<1x128xf32>
      %40 = vector.extract_strided_slice %29 {offsets = [1, 0], sizes = [1, 128], strides = [1, 1]} : vector<2x128xf32> to vector<1x128xf32>
      %41 = arith.mulf %39, %40 : vector<1x128xf32>
      %42 = vector.shape_cast %41 : vector<1x128xf32> to vector<1x1x128xf32>
      %cst_23 = arith.constant dense<0.000000e+00> : vector<1xf32>
      %43 = vector.multi_reduction <add>, %42, %cst_23 [1, 2] : vector<1x1x128xf32> to vector<1xf32>
      %44 = vector.shape_cast %43 : vector<1xf32> to vector<1x1x1xf32>
      %45 = vector.extract %44[0, 0, 0] : f32 from vector<1x1x1xf32>
      %cst_24 = arith.constant 6.250000e-05 : f32
      %46 = arith.mulf %cst_24, %45 : f32
      %47 = arith.addf %38, %46 : f32
      %48 = arith.addf %20, %47 : f32
      %c0_25 = arith.constant 0 : index
      %c0_26 = arith.constant 0 : index
      %49 = memref.load %arg5[%c0_25, %c0_26] : memref<1x1xf32, #tpu.memory_space<smem>>
      memref.store %48, %arg5[%c0_25, %c0_26] : memref<1x1xf32, #tpu.memory_space<smem>>
    } else {
    }
    return
  }
  func.func @transform_0(%arg0: i32) -> (i32, i32) {
    %c0_i32 = arith.constant 0 : i32
    %c0_i32_0 = arith.constant 0 : i32
    return %arg0, %c0_i32 : i32, i32
  }
  func.func @transform_1(%arg0: i32) -> (i32, i32) {
    %c0_i32 = arith.constant 0 : i32
    %c0_i32_0 = arith.constant 0 : i32
    return %arg0, %c0_i32 : i32, i32
  }
  func.func @transform_2(%arg0: i32) -> (i32, i32) {
    %c0_i32 = arith.constant 0 : i32
    %c0_i32_0 = arith.constant 0 : i32
    %c0_i32_1 = arith.constant 0 : i32
    return %c0_i32, %c0_i32_0 : i32, i32
  }
  func.func @transform_3(%arg0: i32) -> (i32, i32) {
    %c0_i32 = arith.constant 0 : i32
    %c0_i32_0 = arith.constant 0 : i32
    %c0_i32_1 = arith.constant 0 : i32
    return %c0_i32, %c0_i32_0 : i32, i32
  }
  func.func @transform_4(%arg0: i32) -> (i32, i32) {
    %c0_i32 = arith.constant 0 : i32
    %c0_i32_0 = arith.constant 0 : i32
    %c0_i32_1 = arith.constant 0 : i32
    return %c0_i32, %c0_i32_0 : i32, i32
  }
}

</mosaic_0001>

<llo_original>
// kernel: tpu_custom_call.1
$region0: #{tpu_custom_call.1}
  #allocation0 [shape = 'u32[]', space=smem, size = 0x4, offset = 0x4, fixed_abs, tag = 'smem constant byte address 0x4 - core index']
  #allocation1 [shape = 'u32[72,128]{1,0:T(1,128)}', space=vmem, size = 0x9000, scoped, tag = 'internal scratch']
  #allocation2 [shape = 'f32[8,128]{1,0:T(8,128)}', space=vmem, size = 0x1000, scoped, tag = 'scratch operand']
  %s0 = inlined_call_operand.hbm [shape: f32[8,128], index: 0, kind: input, shape index: {}]
  %s1 = inlined_call_operand.hbm [shape: f32[8,128], index: 1, kind: input, shape index: {}]
  %s2 = inlined_call_operand.hbm [shape: f32[1,128], index: 2, kind: input, shape index: {}]
  %s3 = inlined_call_operand.vmem [shape: f32[2,128], index: 3, kind: input, shape index: {}]
  %s4 = inlined_call_operand.hbm [shape: f32[1,1], index: 4, kind: output, shape index: {}]
  %s5 = sld [smem:[#allocation0]]
  $region46: #{tpu_custom_call.1} parent=0
    _
  %s7 = ssub.s32 1, %s5
  %s8 = scalar_select 0, %s7, %s5
  $region1: #{tpu_custom_call.1} parent=0
    #allocation3 [shape = 'u8[4096]{0}', space=vmem, size = 0x1000, scoped, tag = 'input window, operand 0, single buffered']
    #allocation4 [shape = 's32[1]{0}', space=sflag, size = 0x4, scoped, tag = 'scoped memory for tpu_custom_call.1']
    #allocation5 [shape = 's32[1]{0}', space=sflag, size = 0x4, scoped, tag = 'scoped memory for tpu_custom_call.1']
    #allocation6 [shape = 'u8[4096]{0}', space=vmem, size = 0x1000, scoped, tag = 'input window, operand 1, single buffered']
    #allocation7 [shape = 's32[1]{0}', space=sflag, size = 0x4, scoped, tag = 'scoped memory for tpu_custom_call.1']
    #allocation8 [shape = 'u8[512]{0}', space=vmem, size = 0x400, scoped, tag = 'input window, operand 2, single buffered']
    #allocation9 [shape = 'u8[512]{0}', space=smem, size = 0x200, scoped, tag = 'output window, operand 0, single buffered']
    %9 = vsyncpa [#allocation4], 0
    %10 = vsyncpa [#allocation7], 0
    %11 = vsyncpa [#allocation5], 0
    // Predicated region
    $region2: #{tpu_custom_call.1} parent=1 // pred_check
      _
    $region3: #{tpu_custom_call.1} parent=1 // pred_check_branch
      %13 = sbr.rel (0) target = $region5
    $region4: #{tpu_custom_call.1} parent=1 // pred_region
      %15 = vsyncadd [#allocation4], 0
      %s17 = sshll.u32 %s0, 4
      %s18 = int_to_ptr.hbm [resolvable:$true] %s17
      %s19 = sshll.u32 [#allocation3], 4
      %s20 = int_to_ptr.vmem [resolvable:$true] %s19
      %22 = dma.hbm_to_vmem [thread:$0]  %s18, 128, %s20, [#allocation4]
    $region5: #{tpu_custom_call.1} parent=1 // pred_fallthru
      _
    // Predicated region
    $region6: #{tpu_custom_call.1} parent=1 // pred_check
      _
    $region7: #{tpu_custom_call.1} parent=1 // pred_check_branch
      %24 = sbr.rel (0) target = $region9
    $region8: #{tpu_custom_call.1} parent=1 // pred_region
      %26 = vsyncadd [#allocation7], 0
      %s28 = sshll.u32 %s1, 4
      %s29 = int_to_ptr.hbm [resolvable:$true] %s28
      %s30 = sshll.u32 [#allocation6], 4
      %s31 = int_to_ptr.vmem [resolvable:$true] %s30
      %33 = dma.hbm_to_vmem [thread:$0]  %s29, 128, %s31, [#allocation7]
    $region9: #{tpu_custom_call.1} parent=1 // pred_fallthru
      _
    // Predicated region
    $region10: #{tpu_custom_call.1} parent=1 // pred_check
      _
    $region11: #{tpu_custom_call.1} parent=1 // pred_check_branch
      %35 = sbr.rel (0) target = $region13
    $region12: #{tpu_custom_call.1} parent=1 // pred_region
      %37 = vsyncadd [#allocation7], 0
      %s39 = sshll.u32 %s2, 4
      %s40 = int_to_ptr.hbm [resolvable:$true] %s39
      %s41 = sshll.u32 [#allocation8], 4
      %s42 = int_to_ptr.vmem [resolvable:$true] %s41
      %44 = dma.hbm_to_vmem [thread:$0]  %s40, 16, %s42, [#allocation7]
    $region13: #{tpu_custom_call.1} parent=1 // pred_fallthru
      _
    // Predicated region
    $region14: #{tpu_custom_call.1} parent=1 // pred_check
      _
    $region15: #{tpu_custom_call.1} parent=1 // pred_check_branch
      %46 = sbr.rel (0) target = $region17
    $region16: #{tpu_custom_call.1} parent=1 // pred_region
      _
    $region17: #{tpu_custom_call.1} parent=1 // pred_fallthru
      _
    // Predicated region
    $region18: #{tpu_custom_call.1} parent=1 // pred_check
      _
    $region19: #{tpu_custom_call.1} parent=1 // pred_check_branch
      %48 = sbr.rel (0) target = $region21
    $region20: #{tpu_custom_call.1} parent=1 // pred_region
      %50 = dma.done [#allocation4], 128
    $region21: #{tpu_custom_call.1} parent=1 // pred_fallthru
      _
    // Predicated region
    $region22: #{tpu_custom_call.1} parent=1 // pred_check
      _
    $region23: #{tpu_custom_call.1} parent=1 // pred_check_branch
      %52 = sbr.rel (0) target = $region25
    $region24: #{tpu_custom_call.1} parent=1 // pred_region
      %54 = dma.done [#allocation7], 128
    $region25: #{tpu_custom_call.1} parent=1 // pred_fallthru
      _
    // Predicated region
    $region26: #{tpu_custom_call.1} parent=1 // pred_check
      _
    $region27: #{tpu_custom_call.1} parent=1 // pred_check_branch
      %56 = sbr.rel (0) target = $region29
    $region28: #{tpu_custom_call.1} parent=1 // pred_region
      %58 = dma.done [#allocation7], 16
    $region29: #{tpu_custom_call.1} parent=1 // pred_fallthru
      _
    %p59 = scmp.eq.s32.totalorder 0, 0
    // Predicated region
    $region30: #{tpu_custom_call.1} parent=1 // pred_check
      %p60 = pneg %p59
    $region31: #{tpu_custom_call.1} parent=1 // pred_check_branch
      %62 = sbr.rel (%p60) target = $region33
    $region32: #{tpu_custom_call.1} parent=1 // pred_region
      %63 = vst [vmem:[#allocation2] sm:$0xff] 0.0
    $region33: #{tpu_custom_call.1} parent=1 // pred_fallthru
      _
    %v64 = vld [vmem:[#allocation3] sm:$0xff]
    %v65 = vld [vmem:[#allocation6] sm:$0xff]
    %v66 = vsub.f32 %v64, %v65
    %v67 = vmul.f32 %v66, %v66
    %v68 = vld [vmem:[#allocation2] sm:$0xff]
    %v69 = vadd.f32 %v67, 0.0
    %v70 = vadd.f32 %v68, %v69
    %71 = vst [vmem:[#allocation2] sm:$0xff] %v70
    // Predicated region
    $region34: #{tpu_custom_call.1} parent=1 // pred_check
      %p72 = pneg %p59
    $region35: #{tpu_custom_call.1} parent=1 // pred_check_branch
      %74 = sbr.rel (%p72) target = $region37
    $region36: #{tpu_custom_call.1} parent=1 // pred_region
      %v75 = vld [vmem:[#allocation2] sm:$0xff]
      %76 = vadd.xlane.f32.xlu0 %v75
      %v77 = vpop.xlane.xlu0 %76
      %v78 = vrot.slane %v77, 4
      %v79 = vadd.f32 %v77, %v78
      %v80 = vrot.slane %v79, 2
      %v81 = vadd.f32 %v79, %v80
      %v82 = vrot.slane %v81, 1
      %v83 = vadd.f32 %v81, %v82
      %s84 = vtos %v83
      %s85 = smul.f32 %s84, 0.03125
      %v86 = vld [vmem:[#allocation8] sm:$0x1]
      %v87 = vmax.f32 %v86, 0.0
      %vm88 = vcmask 1040384
      %v89 = vsel %vm88, %v87, 0.0
      %90 = vadd.xlane.f32.xlu0 %v89
      %v91 = vpop.xlane.xlu0 %90
      %v92 = vrot.slane %v91, 4
      %v93 = vadd.f32 %v91, %v92
      %v94 = vrot.slane %v93, 2
      %v95 = vadd.f32 %v93, %v94
      %v96 = vrot.slane %v95, 1
      %v97 = vadd.f32 %v95, %v96
      %s98 = vtos %v97
      %s99 = smul.f32 %s98, 0.00078125
      %v100 = vld [vmem:[%s3] sm:$0x3]
      %v101 = vmul.f32 %v100, %v100
      %v102 = vsel %vm88, %v101, 0.0
      %103 = vadd.xlane.f32.xlu0 %v102
      %v104 = vpop.xlane.xlu0 %103
      %v105 = vrot.slane %v104, 4
      %v106 = vadd.f32 %v104, %v105
      %v107 = vrot.slane %v106, 2
      %v108 = vadd.f32 %v106, %v107
      %v109 = vrot.slane %v108, 1
      %v110 = vadd.f32 %v108, %v109
      %s111 = vtos %v110
      %s112 = smul.f32 %s111, 0.00125
      %s113 = sadd.f32 %s99, %s112
      %v115 = vrot.slane %v101, 1
      %v117 = vsel %vm88, %v115, 0.0
      %118 = vadd.xlane.f32.xlu0 %v117
      %v119 = vpop.xlane.xlu0 %118
      %v120 = vrot.slane %v119, 4
      %v121 = vadd.f32 %v119, %v120
      %v122 = vrot.slane %v121, 2
      %v123 = vadd.f32 %v121, %v122
      %v124 = vrot.slane %v123, 1
      %v125 = vadd.f32 %v123, %v124
      %s126 = vtos %v125
      %s127 = smul.f32 %s126, 6.25e-05
      %s128 = sadd.f32 %s113, %s127
      %s129 = sadd.f32 %s85, %s128
      %s130 = scalar_lea.smem [#allocation9], 0
      %131 = sst [smem:[%s130]] %s129
    $region37: #{tpu_custom_call.1} parent=1 // pred_fallthru
      _
    // Predicated region
    $region38: #{tpu_custom_call.1} parent=1 // pred_check
      _
    $region39: #{tpu_custom_call.1} parent=1 // pred_check_branch
      %133 = sbr.rel (0) target = $region41
    $region40: #{tpu_custom_call.1} parent=1 // pred_region
      %135 = vsyncadd [#allocation5], 0
      %s137 = sshll.u32 %s4, 4
      %s138 = int_to_ptr.hbm [resolvable:$true] %s137
      %140 = dma.smem_to_hbm [#allocation9], 16, %s138, [#allocation5]
    $region41: #{tpu_custom_call.1} parent=1 // pred_fallthru
      _
    // Predicated region
    $region42: #{tpu_custom_call.1} parent=1 // pred_check
      _
    $region43: #{tpu_custom_call.1} parent=1 // pred_check_branch
      %142 = sbr.rel (0) target = $region45
    $region44: #{tpu_custom_call.1} parent=1 // pred_region
      %144 = dma.done [#allocation5], 16
    $region45: #{tpu_custom_call.1} parent=1 // pred_fallthru
      _
    %145 = sfence
    %146 = vsyncpa [#allocation4], 1
    %147 = vsyncpa [#allocation7], 1
    %148 = vsyncpa [#allocation5], 1

</llo_original>
